<compile_context>
chip_gen: v5e
topology: v5e:2x2
jax: 0.10.0
libtpu: 0.0.40
codegen_flags: <defaults>
</compile_context>

<pallas_src>
import jax
import jax.numpy as jnp
from jax.experimental import pallas as pl
from jax.experimental.pallas import tpu as pltpu


def _make_fused_kernel(T2, M2, mN):
    """Fused ResnetBlock kernel.

    pT_ref   : (K1, T2*M2)  conv1 im2col (+ones row), one column per
                            (conv2-tap, output-position), zero cols = padding.
    w1T_ref  : (N, K1)      conv1 weight (bias folded in as last column).
    w2T_ref  : (T2*mN, N)   conv2 weight, rows ordered (tap, out-channel).
    xsT_ref  : (Cin, M2)    strided-subsampled input for the 1x1 shortcut.
    wsT_ref  : (mN, Cin)    shortcut weight.
    bias_ref : (mN, 1)      b2 + bs (conv2 + shortcut biases).
    o_ref    : (mN, M2)     fused output (lane-dense, M2 on the lane axis).
    """

    def kernel(pT_ref, w1T_ref, w2T_ref, xsT_ref, wsT_ref, bias_ref, o_ref):
        # conv1 for all conv2 taps in ONE matmul (K folded), bias via ones-row.
        y = jnp.dot(w1T_ref[...], pT_ref[...],
                    preferred_element_type=jnp.float32)          # (N, T2*M2)
        y = jnp.where(y >= 0, y, 0.2 * y)                        # LeakyReLU(0.2)

        # shortcut (1x1 strided conv) + both remaining biases.
        acc = jnp.dot(wsT_ref[...], xsT_ref[...],
                      preferred_element_type=jnp.float32)        # (mN, M2)
        acc = acc + bias_ref[...].astype(jnp.float32)

        # conv2: accumulate the T2 taps (static, unrolled; all lane-dense).
        for t in range(T2):
            acc = acc + jnp.dot(
                w2T_ref[t * mN:(t + 1) * mN, :],                 # (mN, N)
                y[:, t * M2:(t + 1) * M2],                       # (N, M2)
                preferred_element_type=jnp.float32)

        o_ref[...] = acc.astype(o_ref.dtype)

    return kernel


def resnet_block_pallas(x_nchw, params):
    """Forward pass of ResnetBlock.  x_nchw: (B, Cin, H, W) -> (B, m*N, Hs, Ws)."""
    w1, b1, w2, b2, ws, bs = (
        params["w1"], params["b1"], params["w2"], params["b2"],
        params["ws"], params["bs"],
    )
    B, Cin, H, W = x_nchw.shape
    KH2, KW2, N, mN = w2.shape
    st, sf = KH2 - 2, KW2 - 2
    Hs = (H - 1) // st + 1
    Wsp = (W - 1) // sf + 1
    M2 = B * Hs * Wsp
    T2 = KH2 * KW2
    K1 = 3 * 3 * Cin + 1  # conv1 taps*Cin + folded-bias ones row

    dt = x_nchw.dtype
    x = jnp.transpose(x_nchw, (0, 2, 3, 1))                      # NHWC (tiny)

    # --- XLA glue: build the transposed im2col matrices (all <= ~300 KB) ---
    # conv1 im2col with an extra ones channel (folds b1; zero in pad region).
    xp1 = jnp.pad(x, ((0, 0), (1, 1), (1, 1), (0, 0)))
    cols = [xp1[:, kh:kh + H, kw:kw + W, :] for kh in range(3) for kw in range(3)]
    cols.append(jnp.ones((B, H, W, 1), dt))
    P1 = jnp.concatenate(cols, axis=-1)                          # (B,H,W,K1)
    # conv2 zero padding (=2): ones channel becomes 0 there -> y contributes 0.
    P1p = jnp.pad(P1, ((0, 0), (2, 2), (2, 2), (0, 0)))
    # one strided patch per conv2 tap, evaluated only on the cropped Hs x Ws grid.
    taps = [
        P1p[:, kh2:kh2 + st * Hs:st, kw2:kw2 + sf * Wsp:sf, :].reshape(M2, K1)
        for kh2 in range(KH2) for kw2 in range(KW2)
    ]
    patchesT = jnp.transpose(jnp.stack(taps, 0), (2, 0, 1)).reshape(K1, T2 * M2)

    # shortcut input: 1x1 conv stride (st, sf) == strided subsample of x.
    xsT = x[:, ::st, ::sf, :].reshape(M2, Cin).T                 # (Cin, M2)

    # weights, transposed so channels sit on sublanes and positions on lanes.
    w1T = jnp.concatenate([w1.reshape(9 * Cin, N), b1.reshape(1, N)], axis=0).T
    w2T = jnp.transpose(w2, (0, 1, 3, 2)).reshape(T2 * mN, N)    # rows (tap, cout)
    wsT = ws.reshape(Cin, mN).T                                  # (mN, Cin)
    bias = (b2 + bs).reshape(mN, 1)

    out = pl.pallas_call(
        _make_fused_kernel(T2, M2, mN),
        out_shape=jax.ShapeDtypeStruct((mN, M2), dt),
        grid_spec=pltpu.PrefetchScalarGridSpec(
            num_scalar_prefetch=0,
            grid=(1,),
            in_specs=[
                pl.BlockSpec((K1, T2 * M2), lambda i: (0, 0)),
                pl.BlockSpec((N, K1), lambda i: (0, 0)),
                pl.BlockSpec((T2 * mN, N), lambda i: (0, 0)),
                pl.BlockSpec((Cin, M2), lambda i: (0, 0)),
                pl.BlockSpec((mN, Cin), lambda i: (0, 0)),
                pl.BlockSpec((mN, 1), lambda i: (0, 0)),
            ],
            out_specs=pl.BlockSpec((mN, M2), lambda i: (0, 0)),
        ),
        compiler_params=pltpu.CompilerParams(
            dimension_semantics=("arbitrary",)),
    )(patchesT, w1T, w2T, xsT, wsT, bias)

    # (mN, B*Hs*Ws) -> NCHW (tiny transpose at the boundary).
    return jnp.transpose(out.reshape(mN, B, Hs, Wsp), (1, 0, 2, 3))


# ---------------------------------------------------------------------------
# Pure-JAX reference (for correctness check)
# ---------------------------------------------------------------------------
def _conv_ref(x, w, b, stride, padding):
    out = jax.lax.conv_general_dilated(
        x, w, window_strides=stride,
        padding=((padding[0], padding[0]), (padding[1], padding[1])),
        dimension_numbers=("NHWC", "HWIO", "NHWC"),
    )
    return out + b.reshape(1, 1, 1, -1)


def resnet_block_ref(x_nchw, params):
    w1, b1, w2, b2, ws, bs = (
        params["w1"], params["b1"], params["w2"], params["b2"],
        params["ws"], params["bs"],
    )
    st = w2.shape[0] - 2
    sf = w2.shape[1] - 2
    x = jnp.transpose(x_nchw, (0, 2, 3, 1))
    y = _conv_ref(x, w1, b1, (1, 1), (1, 1))
    y = jnp.where(y >= 0, y, 0.2 * y)
    y2 = _conv_ref(y, w2, b2, (st, sf), (2, 2))
    sc = _conv_ref(x, ws, bs, (st, sf), (0, 0))
    res = sc + y2[:, : sc.shape[1], : sc.shape[2], :]
    return jnp.transpose(res, (0, 3, 1, 2))


if __name__ == "__main__":
    # ResnetBlock(in_channels=4, N=8, m=2, st=2, sf=2, flag=...)
    Cin, N, m, st, sf = 4, 8, 2, 2, 2
    mN = m * N
    B, H, W = 2, 16, 16

    key = jax.random.PRNGKey(0)
    k_x, k1, k2, k3, k4, k5, k6 = jax.random.split(key, 7)
    x = jax.random.normal(k_x, (B, Cin, H, W), dtype=jnp.float32)

    params = {
        "w1": 0.1 * jax.random.normal(k1, (3, 3, Cin, N), dtype=jnp.float32),
        "b1": 0.1 * jax.random.normal(k2, (N,), dtype=jnp.float32),
        "w2": 0.1 * jax.random.normal(k3, (st + 2, sf + 2, N, mN), dtype=jnp.float32),
        "b2": 0.1 * jax.random.normal(k4, (mN,), dtype=jnp.float32),
        "ws": 0.1 * jax.random.normal(k5, (1, 1, Cin, mN), dtype=jnp.float32),
        "bs": 0.1 * jax.random.normal(k6, (mN,), dtype=jnp.float32),
    }

    out = jax.jit(resnet_block_pallas)(x, params)
    out = jax.block_until_ready(out)

    ref = jax.block_until_ready(resnet_block_ref(x, params))
    assert out.shape == ref.shape == (B, mN, (H - 1) // st + 1, (W - 1) // sf + 1)
    assert jnp.allclose(out, ref, rtol=1e-2, atol=1e-2), (
        float(jnp.max(jnp.abs(out - ref)))
    )
    print("KERNEL_OK")
</pallas_src>

<mosaic_0001>
module attributes {stable_mosaic.version = 11 : i64} {
  func.func @kernel(%arg0: i32, %arg1: memref<37x2048xf32, #tpu.memory_space<vmem>>, %arg2: memref<8x37xf32, #tpu.memory_space<vmem>>, %arg3: memref<256x8xf32, #tpu.memory_space<vmem>>, %arg4: memref<4x128xf32, #tpu.memory_space<vmem>>, %arg5: memref<16x4xf32, #tpu.memory_space<vmem>>, %arg6: memref<16x1xf32, #tpu.memory_space<vmem>>, %arg7: memref<16x128xf32, #tpu.memory_space<vmem>>) attributes {dimension_semantics = [#tpu.dimension_semantics<arbitrary>], iteration_bounds = array<i64: 1>, scalar_prefetch = 0 : i64, scratch_operands = 0 : i64, tpu.core_type = #tpu.core_type<tc>, window_params = [{pipeline_mode = #tpu.pipeline_mode<synchronous>, transform_indices = @transform_0, window_bounds = array<i64: 37, 2048>}, {pipeline_mode = #tpu.pipeline_mode<synchronous>, transform_indices = @transform_1, window_bounds = array<i64: 8, 37>}, {pipeline_mode = #tpu.pipeline_mode<synchronous>, transform_indices = @transform_2, window_bounds = array<i64: 256, 8>}, {pipeline_mode = #tpu.pipeline_mode<synchronous>, transform_indices = @transform_3, window_bounds = array<i64: 4, 128>}, {pipeline_mode = #tpu.pipeline_mode<synchronous>, transform_indices = @transform_4, window_bounds = array<i64: 16, 4>}, {pipeline_mode = #tpu.pipeline_mode<synchronous>, transform_indices = @transform_5, window_bounds = array<i64: 16, 1>}, {pipeline_mode = #tpu.pipeline_mode<synchronous>, transform_indices = @transform_6, window_bounds = array<i64: 16, 128>}]} {
    %c0 = arith.constant 0 : index
    %c0_0 = arith.constant 0 : index
    %0 = vector.load %arg2[%c0, %c0_0] : memref<8x37xf32, #tpu.memory_space<vmem>>, vector<8x37xf32>
    %c0_1 = arith.constant 0 : index
    %c0_2 = arith.constant 0 : index
    %1 = vector.load %arg1[%c0_1, %c0_2] : memref<37x2048xf32, #tpu.memory_space<vmem>>, vector<37x2048xf32>
    %cst = arith.constant dense<0.000000e+00> : vector<8x2048xf32>
    %2 = tpu.matmul %0, %1, %cst {dimension_numbers = #tpu.dot_dimension_numbers<[1], [0], [0], [1], [0, 0, 1, 1], [], []>} : vector<8x37xf32>, vector<37x2048xf32>, vector<8x2048xf32> -> vector<8x2048xf32>
    %cst_3 = arith.constant 0.000000e+00 : f32
    %3 = vector.broadcast %cst_3 : f32 to vector<8x2048xf32>
    %4 = arith.cmpf oge, %2, %3 : vector<8x2048xf32>
    %cst_4 = arith.constant 2.000000e-01 : f32
    %5 = vector.broadcast %cst_4 : f32 to vector<8x2048xf32>
    %6 = arith.mulf %5, %2 : vector<8x2048xf32>
    %7 = arith.select %4, %2, %6 : vector<8x2048xi1>, vector<8x2048xf32>
    %c0_5 = arith.constant 0 : index
    %c0_6 = arith.constant 0 : index
    %8 = vector.load %arg5[%c0_5, %c0_6] : memref<16x4xf32, #tpu.memory_space<vmem>>, vector<16x4xf32>
    %c0_7 = arith.constant 0 : index
    %c0_8 = arith.constant 0 : index
    %9 = vector.load %arg4[%c0_7, %c0_8] : memref<4x128xf32, #tpu.memory_space<vmem>>, vector<4x128xf32>
    %cst_9 = arith.constant dense<0.000000e+00> : vector<16x128xf32>
    %10 = tpu.matmul %8, %9, %cst_9 {dimension_numbers = #tpu.dot_dimension_numbers<[1], [0], [0], [1], [0, 0, 1, 1], [], []>} : vector<16x4xf32>, vector<4x128xf32>, vector<16x128xf32> -> vector<16x128xf32>
    %c0_10 = arith.constant 0 : index
    %c0_11 = arith.constant 0 : index
    %11 = vector.load %arg6[%c0_10, %c0_11] : memref<16x1xf32, #tpu.memory_space<vmem>>, vector<16x1xf32>
    %12 = vector.broadcast %11 : vector<16x1xf32> to vector<16x128xf32>
    %13 = arith.addf %10, %12 : vector<16x128xf32>
    %c0_12 = arith.constant 0 : index
    %c0_13 = arith.constant 0 : index
    %14 = vector.load %arg3[%c0_12, %c0_13] : memref<256x8xf32, #tpu.memory_space<vmem>>, vector<16x8xf32>
    %15 = vector.extract_strided_slice %7 {offsets = [0, 0], sizes = [8, 128], strides = [1, 1]} : vector<8x2048xf32> to vector<8x128xf32>
    %cst_14 = arith.constant dense<0.000000e+00> : vector<16x128xf32>
    %16 = tpu.matmul %14, %15, %cst_14 {dimension_numbers = #tpu.dot_dimension_numbers<[1], [0], [0], [1], [0, 0, 1, 1], [], []>} : vector<16x8xf32>, vector<8x128xf32>, vector<16x128xf32> -> vector<16x128xf32>
    %17 = arith.addf %13, %16 : vector<16x128xf32>
    %c16 = arith.constant 16 : index
    %c0_15 = arith.constant 0 : index
    %18 = vector.load %arg3[%c16, %c0_15] : memref<256x8xf32, #tpu.memory_space<vmem>>, vector<16x8xf32>
    %19 = vector.extract_strided_slice %7 {offsets = [0, 128], sizes = [8, 128], strides = [1, 1]} : vector<8x2048xf32> to vector<8x128xf32>
    %cst_16 = arith.constant dense<0.000000e+00> : vector<16x128xf32>
    %20 = tpu.matmul %18, %19, %cst_16 {dimension_numbers = #tpu.dot_dimension_numbers<[1], [0], [0], [1], [0, 0, 1, 1], [], []>} : vector<16x8xf32>, vector<8x128xf32>, vector<16x128xf32> -> vector<16x128xf32>
    %21 = arith.addf %17, %20 : vector<16x128xf32>
    %c32 = arith.constant 32 : index
    %c0_17 = arith.constant 0 : index
    %22 = vector.load %arg3[%c32, %c0_17] : memref<256x8xf32, #tpu.memory_space<vmem>>, vector<16x8xf32>
    %23 = vector.extract_strided_slice %7 {offsets = [0, 256], sizes = [8, 128], strides = [1, 1]} : vector<8x2048xf32> to vector<8x128xf32>
    %cst_18 = arith.constant dense<0.000000e+00> : vector<16x128xf32>
    %24 = tpu.matmul %22, %23, %cst_18 {dimension_numbers = #tpu.dot_dimension_numbers<[1], [0], [0], [1], [0, 0, 1, 1], [], []>} : vector<16x8xf32>, vector<8x128xf32>, vector<16x128xf32> -> vector<16x128xf32>
    %25 = arith.addf %21, %24 : vector<16x128xf32>
    %c48 = arith.constant 48 : index
    %c0_19 = arith.constant 0 : index
    %26 = vector.load %arg3[%c48, %c0_19] : memref<256x8xf32, #tpu.memory_space<vmem>>, vector<16x8xf32>
    %27 = vector.extract_strided_slice %7 {offsets = [0, 384], sizes = [8, 128], strides = [1, 1]} : vector<8x2048xf32> to vector<8x128xf32>
    %cst_20 = arith.constant dense<0.000000e+00> : vector<16x128xf32>
    %28 = tpu.matmul %26, %27, %cst_20 {dimension_numbers = #tpu.dot_dimension_numbers<[1], [0], [0], [1], [0, 0, 1, 1], [], []>} : vector<16x8xf32>, vector<8x128xf32>, vector<16x128xf32> -> vector<16x128xf32>
    %29 = arith.addf %25, %28 : vector<16x128xf32>
    %c64 = arith.constant 64 : index
    %c0_21 = arith.constant 0 : index
    %30 = vector.load %arg3[%c64, %c0_21] : memref<256x8xf32, #tpu.memory_space<vmem>>, vector<16x8xf32>
    %31 = vector.extract_strided_slice %7 {offsets = [0, 512], sizes = [8, 128], strides = [1, 1]} : vector<8x2048xf32> to vector<8x128xf32>
    %cst_22 = arith.constant dense<0.000000e+00> : vector<16x128xf32>
    %32 = tpu.matmul %30, %31, %cst_22 {dimension_numbers = #tpu.dot_dimension_numbers<[1], [0], [0], [1], [0, 0, 1, 1], [], []>} : vector<16x8xf32>, vector<8x128xf32>, vector<16x128xf32> -> vector<16x128xf32>
    %33 = arith.addf %29, %32 : vector<16x128xf32>
    %c80 = arith.constant 80 : index
    %c0_23 = arith.constant 0 : index
    %34 = vector.load %arg3[%c80, %c0_23] : memref<256x8xf32, #tpu.memory_space<vmem>>, vector<16x8xf32>
    %35 = vector.extract_strided_slice %7 {offsets = [0, 640], sizes = [8, 128], strides = [1, 1]} : vector<8x2048xf32> to vector<8x128xf32>
    %cst_24 = arith.constant dense<0.000000e+00> : vector<16x128xf32>
    %36 = tpu.matmul %34, %35, %cst_24 {dimension_numbers = #tpu.dot_dimension_numbers<[1], [0], [0], [1], [0, 0, 1, 1], [], []>} : vector<16x8xf32>, vector<8x128xf32>, vector<16x128xf32> -> vector<16x128xf32>
    %37 = arith.addf %33, %36 : vector<16x128xf32>
    %c96 = arith.constant 96 : index
    %c0_25 = arith.constant 0 : index
    %38 = vector.load %arg3[%c96, %c0_25] : memref<256x8xf32, #tpu.memory_space<vmem>>, vector<16x8xf32>
    %39 = vector.extract_strided_slice %7 {offsets = [0, 768], sizes = [8, 128], strides = [1, 1]} : vector<8x2048xf32> to vector<8x128xf32>
    %cst_26 = arith.constant dense<0.000000e+00> : vector<16x128xf32>
    %40 = tpu.matmul %38, %39, %cst_26 {dimension_numbers = #tpu.dot_dimension_numbers<[1], [0], [0], [1], [0, 0, 1, 1], [], []>} : vector<16x8xf32>, vector<8x128xf32>, vector<16x128xf32> -> vector<16x128xf32>
    %41 = arith.addf %37, %40 : vector<16x128xf32>
    %c112 = arith.constant 112 : index
    %c0_27 = arith.constant 0 : index
    %42 = vector.load %arg3[%c112, %c0_27] : memref<256x8xf32, #tpu.memory_space<vmem>>, vector<16x8xf32>
    %43 = vector.extract_strided_slice %7 {offsets = [0, 896], sizes = [8, 128], strides = [1, 1]} : vector<8x2048xf32> to vector<8x128xf32>
    %cst_28 = arith.constant dense<0.000000e+00> : vector<16x128xf32>
    %44 = tpu.matmul %42, %43, %cst_28 {dimension_numbers = #tpu.dot_dimension_numbers<[1], [0], [0], [1], [0, 0, 1, 1], [], []>} : vector<16x8xf32>, vector<8x128xf32>, vector<16x128xf32> -> vector<16x128xf32>
    %45 = arith.addf %41, %44 : vector<16x128xf32>
    %c128 = arith.constant 128 : index
    %c0_29 = arith.constant 0 : index
    %46 = vector.load %arg3[%c128, %c0_29] : memref<256x8xf32, #tpu.memory_space<vmem>>, vector<16x8xf32>
    %47 = vector.extract_strided_slice %7 {offsets = [0, 1024], sizes = [8, 128], strides = [1, 1]} : vector<8x2048xf32> to vector<8x128xf32>
    %cst_30 = arith.constant dense<0.000000e+00> : vector<16x128xf32>
    %48 = tpu.matmul %46, %47, %cst_30 {dimension_numbers = #tpu.dot_dimension_numbers<[1], [0], [0], [1], [0, 0, 1, 1], [], []>} : vector<16x8xf32>, vector<8x128xf32>, vector<16x128xf32> -> vector<16x128xf32>
    %49 = arith.addf %45, %48 : vector<16x128xf32>
    %c144 = arith.constant 144 : index
    %c0_31 = arith.constant 0 : index
    %50 = vector.load %arg3[%c144, %c0_31] : memref<256x8xf32, #tpu.memory_space<vmem>>, vector<16x8xf32>
    %51 = vector.extract_strided_slice %7 {offsets = [0, 1152], sizes = [8, 128], strides = [1, 1]} : vector<8x2048xf32> to vector<8x128xf32>
    %cst_32 = arith.constant dense<0.000000e+00> : vector<16x128xf32>
    %52 = tpu.matmul %50, %51, %cst_32 {dimension_numbers = #tpu.dot_dimension_numbers<[1], [0], [0], [1], [0, 0, 1, 1], [], []>} : vector<16x8xf32>, vector<8x128xf32>, vector<16x128xf32> -> vector<16x128xf32>
    %53 = arith.addf %49, %52 : vector<16x128xf32>
    %c160 = arith.constant 160 : index
    %c0_33 = arith.constant 0 : index
    %54 = vector.load %arg3[%c160, %c0_33] : memref<256x8xf32, #tpu.memory_space<vmem>>, vector<16x8xf32>
    %55 = vector.extract_strided_slice %7 {offsets = [0, 1280], sizes = [8, 128], strides = [1, 1]} : vector<8x2048xf32> to vector<8x128xf32>
    %cst_34 = arith.constant dense<0.000000e+00> : vector<16x128xf32>
    %56 = tpu.matmul %54, %55, %cst_34 {dimension_numbers = #tpu.dot_dimension_numbers<[1], [0], [0], [1], [0, 0, 1, 1], [], []>} : vector<16x8xf32>, vector<8x128xf32>, vector<16x128xf32> -> vector<16x128xf32>
    %57 = arith.addf %53, %56 : vector<16x128xf32>
    %c176 = arith.constant 176 : index
    %c0_35 = arith.constant 0 : index
    %58 = vector.load %arg3[%c176, %c0_35] : memref<256x8xf32, #tpu.memory_space<vmem>>, vector<16x8xf32>
    %59 = vector.extract_strided_slice %7 {offsets = [0, 1408], sizes = [8, 128], strides = [1, 1]} : vector<8x2048xf32> to vector<8x128xf32>
    %cst_36 = arith.constant dense<0.000000e+00> : vector<16x128xf32>
    %60 = tpu.matmul %58, %59, %cst_36 {dimension_numbers = #tpu.dot_dimension_numbers<[1], [0], [0], [1], [0, 0, 1, 1], [], []>} : vector<16x8xf32>, vector<8x128xf32>, vector<16x128xf32> -> vector<16x128xf32>
    %61 = arith.addf %57, %60 : vector<16x128xf32>
    %c192 = arith.constant 192 : index
    %c0_37 = arith.constant 0 : index
    %62 = vector.load %arg3[%c192, %c0_37] : memref<256x8xf32, #tpu.memory_space<vmem>>, vector<16x8xf32>
    %63 = vector.extract_strided_slice %7 {offsets = [0, 1536], sizes = [8, 128], strides = [1, 1]} : vector<8x2048xf32> to vector<8x128xf32>
    %cst_38 = arith.constant dense<0.000000e+00> : vector<16x128xf32>
    %64 = tpu.matmul %62, %63, %cst_38 {dimension_numbers = #tpu.dot_dimension_numbers<[1], [0], [0], [1], [0, 0, 1, 1], [], []>} : vector<16x8xf32>, vector<8x128xf32>, vector<16x128xf32> -> vector<16x128xf32>
    %65 = arith.addf %61, %64 : vector<16x128xf32>
    %c208 = arith.constant 208 : index
    %c0_39 = arith.constant 0 : index
    %66 = vector.load %arg3[%c208, %c0_39] : memref<256x8xf32, #tpu.memory_space<vmem>>, vector<16x8xf32>
    %67 = vector.extract_strided_slice %7 {offsets = [0, 1664], sizes = [8, 128], strides = [1, 1]} : vector<8x2048xf32> to vector<8x128xf32>
    %cst_40 = arith.constant dense<0.000000e+00> : vector<16x128xf32>
    %68 = tpu.matmul %66, %67, %cst_40 {dimension_numbers = #tpu.dot_dimension_numbers<[1], [0], [0], [1], [0, 0, 1, 1], [], []>} : vector<16x8xf32>, vector<8x128xf32>, vector<16x128xf32> -> vector<16x128xf32>
    %69 = arith.addf %65, %68 : vector<16x128xf32>
    %c224 = arith.constant 224 : index
    %c0_41 = arith.constant 0 : index
    %70 = vector.load %arg3[%c224, %c0_41] : memref<256x8xf32, #tpu.memory_space<vmem>>, vector<16x8xf32>
    %71 = vector.extract_strided_slice %7 {offsets = [0, 1792], sizes = [8, 128], strides = [1, 1]} : vector<8x2048xf32> to vector<8x128xf32>
    %cst_42 = arith.constant dense<0.000000e+00> : vector<16x128xf32>
    %72 = tpu.matmul %70, %71, %cst_42 {dimension_numbers = #tpu.dot_dimension_numbers<[1], [0], [0], [1], [0, 0, 1, 1], [], []>} : vector<16x8xf32>, vector<8x128xf32>, vector<16x128xf32> -> vector<16x128xf32>
    %73 = arith.addf %69, %72 : vector<16x128xf32>
    %c240 = arith.constant 240 : index
    %c0_43 = arith.constant 0 : index
    %74 = vector.load %arg3[%c240, %c0_43] : memref<256x8xf32, #tpu.memory_space<vmem>>, vector<16x8xf32>
    %75 = vector.extract_strided_slice %7 {offsets = [0, 1920], sizes = [8, 128], strides = [1, 1]} : vector<8x2048xf32> to vector<8x128xf32>
    %cst_44 = arith.constant dense<0.000000e+00> : vector<16x128xf32>
    %76 = tpu.matmul %74, %75, %cst_44 {dimension_numbers = #tpu.dot_dimension_numbers<[1], [0], [0], [1], [0, 0, 1, 1], [], []>} : vector<16x8xf32>, vector<8x128xf32>, vector<16x128xf32> -> vector<16x128xf32>
    %77 = arith.addf %73, %76 : vector<16x128xf32>
    %c0_45 = arith.constant 0 : index
    %c0_46 = arith.constant 0 : index
    %78 = vector.load %arg7[%c0_45, %c0_46] : memref<16x128xf32, #tpu.memory_space<vmem>>, vector<16x128xf32>
    tpu.vector_store %arg7[%c0_45, %c0_46], %77 {strides = array<i32>} : memref<16x128xf32, #tpu.memory_space<vmem>>, vector<16x128xf32>,
    return
  }
  func.func @transform_0(%arg0: i32) -> (i32, i32) {
    %c0_i32 = arith.constant 0 : i32
    %c0_i32_0 = arith.constant 0 : i32
    %c0_i32_1 = arith.constant 0 : i32
    return %c0_i32, %c0_i32_0 : i32, i32
  }
  func.func @transform_1(%arg0: i32) -> (i32, i32) {
    %c0_i32 = arith.constant 0 : i32
    %c0_i32_0 = arith.constant 0 : i32
    %c0_i32_1 = arith.constant 0 : i32
    return %c0_i32, %c0_i32_0 : i32, i32
  }
  func.func @transform_2(%arg0: i32) -> (i32, i32) {
    %c0_i32 = arith.constant 0 : i32
    %c0_i32_0 = arith.constant 0 : i32
    %c0_i32_1 = arith.constant 0 : i32
    return %c0_i32, %c0_i32_0 : i32, i32
  }
  func.func @transform_3(%arg0: i32) -> (i32, i32) {
    %c0_i32 = arith.constant 0 : i32
    %c0_i32_0 = arith.constant 0 : i32
    %c0_i32_1 = arith.constant 0 : i32
    return %c0_i32, %c0_i32_0 : i32, i32
  }
  func.func @transform_4(%arg0: i32) -> (i32, i32) {
    %c0_i32 = arith.constant 0 : i32
    %c0_i32_0 = arith.constant 0 : i32
    %c0_i32_1 = arith.constant 0 : i32
    return %c0_i32, %c0_i32_0 : i32, i32
  }
  func.func @transform_5(%arg0: i32) -> (i32, i32) {
    %c0_i32 = arith.constant 0 : i32
    %c0_i32_0 = arith.constant 0 : i32
    %c0_i32_1 = arith.constant 0 : i32
    return %c0_i32, %c0_i32_0 : i32, i32
  }
  func.func @transform_6(%arg0: i32) -> (i32, i32) {
    %c0_i32 = arith.constant 0 : i32
    %c0_i32_0 = arith.constant 0 : i32
    %c0_i32_1 = arith.constant 0 : i32
    return %c0_i32, %c0_i32_0 : i32, i32
  }
}

</mosaic_0001>

<llo_original>
// kernel: resnet_block_pallas.1
$region0: #{resnet_block_pallas.1}
  #allocation0 [shape = 'u32[]', space=smem, size = 0x4, offset = 0x4, fixed_abs, tag = 'smem constant byte address 0x4 - core index']
  #allocation1 [shape = 'u32[72,128]{1,0:T(1,128)}', space=vmem, size = 0x9000, scoped, tag = 'internal scratch']
  %s0 = inlined_call_operand.vmem [shape: f32[37,2048], index: 0, kind: input, shape index: {}]
  %s1 = inlined_call_operand.vmem [shape: f32[8,37], index: 1, kind: input, shape index: {}]
  %s2 = inlined_call_operand.vmem [shape: f32[256,8], index: 2, kind: input, shape index: {}]
  %s3 = inlined_call_operand.vmem [shape: f32[4,128], index: 3, kind: input, shape index: {}]
  %s4 = inlined_call_operand.vmem [shape: f32[16,4], index: 4, kind: input, shape index: {}]
  %s5 = inlined_call_operand.vmem [shape: f32[16,1], index: 5, kind: input, shape index: {}]
  %s6 = inlined_call_operand.vmem [shape: f32[16,128], index: 6, kind: output, shape index: {}]
  %s7 = sld [smem:[#allocation0]]
  $region34: #{resnet_block_pallas.1} parent=0
    _
  %s9 = ssub.s32 1, %s7
  %s10 = scalar_select 0, %s9, %s7
  // Predicated region
  $region2: #{resnet_block_pallas.1} parent=0 // pred_check
    _
  $region3: #{resnet_block_pallas.1} parent=0 // pred_check_branch
    %12 = sbr.rel (0) target = $region5
  $region4: #{resnet_block_pallas.1} parent=0 // pred_region
    _
  $region5: #{resnet_block_pallas.1} parent=0 // pred_fallthru
    _
  // Predicated region
  $region6: #{resnet_block_pallas.1} parent=0 // pred_check
    _
  $region7: #{resnet_block_pallas.1} parent=0 // pred_check_branch
    %14 = sbr.rel (0) target = $region9
  $region8: #{resnet_block_pallas.1} parent=0 // pred_region
    _
  $region9: #{resnet_block_pallas.1} parent=0 // pred_fallthru
    _
  // Predicated region
  $region10: #{resnet_block_pallas.1} parent=0 // pred_check
    _
  $region11: #{resnet_block_pallas.1} parent=0 // pred_check_branch
    %16 = sbr.rel (0) target = $region13
  $region12: #{resnet_block_pallas.1} parent=0 // pred_region
    _
  $region13: #{resnet_block_pallas.1} parent=0 // pred_fallthru
    _
  // Predicated region
  $region14: #{resnet_block_pallas.1} parent=0 // pred_check
    _
  $region15: #{resnet_block_pallas.1} parent=0 // pred_check_branch
    %18 = sbr.rel (0) target = $region17
  $region16: #{resnet_block_pallas.1} parent=0 // pred_region
    _
  $region17: #{resnet_block_pallas.1} parent=0 // pred_fallthru
    _
  // Predicated region
  $region18: #{resnet_block_pallas.1} parent=0 // pred_check
    _
  $region19: #{resnet_block_pallas.1} parent=0 // pred_check_branch
    %20 = sbr.rel (0) target = $region21
  $region20: #{resnet_block_pallas.1} parent=0 // pred_region
    _
  $region21: #{resnet_block_pallas.1} parent=0 // pred_fallthru
    _
  // Predicated region
  $region22: #{resnet_block_pallas.1} parent=0 // pred_check
    _
  $region23: #{resnet_block_pallas.1} parent=0 // pred_check_branch
    %22 = sbr.rel (0) target = $region25
  $region24: #{resnet_block_pallas.1} parent=0 // pred_region
    _
  $region25: #{resnet_block_pallas.1} parent=0 // pred_fallthru
    _
  %v23 = vld [vmem:[%s1] sm:$0xff]
  %v24 = vld [vmem:[%s0] sm:$0xff]
  %v25 = vld [vmem:[%s0 + $0x8] sm:$0xff]
  %v26 = vld [vmem:[%s0 + $0x10] sm:$0xff]
  %v27 = vld [vmem:[%s0 + $0x18] sm:$0xff]
  %v28 = vld [vmem:[%s0 + $0x20] sm:$0xff]
  %v29 = vld [vmem:[%s0 + $0x28] sm:$0xff]
  %v30 = vld [vmem:[%s0 + $0x30] sm:$0xff]
  %v31 = vld [vmem:[%s0 + $0x38] sm:$0xff]
  %v32 = vld [vmem:[%s0 + $0x40] sm:$0xff]
  %v33 = vld [vmem:[%s0 + $0x48] sm:$0xff]
  %v34 = vld [vmem:[%s0 + $0x50] sm:$0xff]
  %v35 = vld [vmem:[%s0 + $0x58] sm:$0xff]
  %v36 = vld [vmem:[%s0 + $0x60] sm:$0xff]
  %v37 = vld [vmem:[%s0 + $0x68] sm:$0xff]
  %v38 = vld [vmem:[%s0 + $0x70] sm:$0xff]
  %v39 = vld [vmem:[%s0 + $0x78] sm:$0xff]
  %v40 = vld [vmem:[%s0 + $0x80] sm:$0xff]
  %v41 = vld [vmem:[%s0 + $0x88] sm:$0xff]
  %v42 = vld [vmem:[%s0 + $0x90] sm:$0xff]
  %v43 = vld [vmem:[%s0 + $0x98] sm:$0xff]
  %v44 = vld [vmem:[%s0 + $0xa0] sm:$0xff]
  %v45 = vld [vmem:[%s0 + $0xa8] sm:$0xff]
  %v46 = vld [vmem:[%s0 + $0xb0] sm:$0xff]
  %v47 = vld [vmem:[%s0 + $0xb8] sm:$0xff]
  %v48 = vld [vmem:[%s0 + $0xc0] sm:$0xff]
  %v49 = vld [vmem:[%s0 + $0xc8] sm:$0xff]
  %v50 = vld [vmem:[%s0 + $0xd0] sm:$0xff]
  %v51 = vld [vmem:[%s0 + $0xd8] sm:$0xff]
  %v52 = vld [vmem:[%s0 + $0xe0] sm:$0xff]
  %v53 = vld [vmem:[%s0 + $0xe8] sm:$0xff]
  %v54 = vld [vmem:[%s0 + $0xf0] sm:$0xff]
  %v55 = vld [vmem:[%s0 + $0xf8] sm:$0xff]
  %v56 = vld [vmem:[%s0 + $0x100] sm:$0xff]
  %v57 = vld [vmem:[%s0 + $0x108] sm:$0xff]
  %v58 = vld [vmem:[%s0 + $0x110] sm:$0xff]
  %v59 = vld [vmem:[%s0 + $0x118] sm:$0xff]
  %v60 = vld [vmem:[%s0 + $0x120] sm:$0xff]
  %v61 = vld [vmem:[%s0 + $0x128] sm:$0xff]
  %v62 = vld [vmem:[%s0 + $0x130] sm:$0xff]
  %v63 = vld [vmem:[%s0 + $0x138] sm:$0xff]
  %v64 = vld [vmem:[%s0 + $0x140] sm:$0xff]
  %v65 = vld [vmem:[%s0 + $0x148] sm:$0xff]
  %v66 = vld [vmem:[%s0 + $0x150] sm:$0xff]
  %v67 = vld [vmem:[%s0 + $0x158] sm:$0xff]
  %v68 = vld [vmem:[%s0 + $0x160] sm:$0xff]
  %v69 = vld [vmem:[%s0 + $0x168] sm:$0xff]
  %v70 = vld [vmem:[%s0 + $0x170] sm:$0xff]
  %v71 = vld [vmem:[%s0 + $0x178] sm:$0xff]
  %v72 = vld [vmem:[%s0 + $0x180] sm:$0xff]
  %v73 = vld [vmem:[%s0 + $0x188] sm:$0xff]
  %v74 = vld [vmem:[%s0 + $0x190] sm:$0xff]
  %v75 = vld [vmem:[%s0 + $0x198] sm:$0xff]
  %v76 = vld [vmem:[%s0 + $0x1a0] sm:$0xff]
  %v77 = vld [vmem:[%s0 + $0x1a8] sm:$0xff]
  %v78 = vld [vmem:[%s0 + $0x1b0] sm:$0xff]
  %v79 = vld [vmem:[%s0 + $0x1b8] sm:$0xff]
  %v80 = vld [vmem:[%s0 + $0x1c0] sm:$0xff]
  %v81 = vld [vmem:[%s0 + $0x1c8] sm:$0xff]
  %v82 = vld [vmem:[%s0 + $0x1d0] sm:$0xff]
  %v83 = vld [vmem:[%s0 + $0x1d8] sm:$0xff]
  %v84 = vld [vmem:[%s0 + $0x1e0] sm:$0xff]
  %v85 = vld [vmem:[%s0 + $0x1e8] sm:$0xff]
  %v86 = vld [vmem:[%s0 + $0x1f0] sm:$0xff]
  %v87 = vld [vmem:[%s0 + $0x1f8] sm:$0xff]
  %v88 = vld [vmem:[%s0 + $0x200] sm:$0x1f]
  %v89 = vld [vmem:[%s0 + $0x208] sm:$0x1f]
  %v90 = vld [vmem:[%s0 + $0x210] sm:$0x1f]
  %v91 = vld [vmem:[%s0 + $0x218] sm:$0x1f]
  %v92 = vld [vmem:[%s0 + $0x220] sm:$0x1f]
  %v93 = vld [vmem:[%s0 + $0x228] sm:$0x1f]
  %v94 = vld [vmem:[%s0 + $0x230] sm:$0x1f]
  %v95 = vld [vmem:[%s0 + $0x238] sm:$0x1f]
  %v96 = vld [vmem:[%s0 + $0x240] sm:$0x1f]
  %v97 = vld [vmem:[%s0 + $0x248] sm:$0x1f]
  %v98 = vld [vmem:[%s0 + $0x250] sm:$0x1f]
  %v99 = vld [vmem:[%s0 + $0x258] sm:$0x1f]
  %v100 = vld [vmem:[%s0 + $0x260] sm:$0x1f]
  %v101 = vld [vmem:[%s0 + $0x268] sm:$0x1f]
  %v102 = vld [vmem:[%s0 + $0x270] sm:$0x1f]
  %v103 = vld [vmem:[%s0 + $0x278] sm:$0x1f]
  %vm104 = vcmask 302080
  %v106 = vsel %vm104, %v23, 0
  %vm108 = vcmask 1044480
  %v110 = vsel %vm108, %v88, 0
  %v113 = vsel %vm108, %v89, 0
  %v116 = vsel %vm108, %v90, 0
  %v119 = vsel %vm108, %v91, 0
  %v122 = vsel %vm108, %v92, 0
  %v125 = vsel %vm108, %v93, 0
  %v128 = vsel %vm108, %v94, 0
  %v131 = vsel %vm108, %v95, 0
  %v134 = vsel %vm108, %v96, 0
  %v137 = vsel %vm108, %v97, 0
  %v140 = vsel %vm108, %v98, 0
  %v143 = vsel %vm108, %v99, 0
  %v146 = vsel %vm108, %v100, 0
  %v149 = vsel %vm108, %v101, 0
  %v152 = vsel %vm108, %v102, 0
  %v155 = vsel %vm108, %v103, 0
  %157 = vmatpush.msra.mxu0 0.0
  %158 = vmatpush.msra.mxu0 0.0
  %159 = vmatpush.msra.mxu0 0.0
  %160 = vmatpush.msra.mxu0 0.0
  %161 = vmatpush.msra.mxu0 0.0
  %162 = vmatpush.msra.mxu0 0.0
  %163 = vmatpush.msra.mxu0 0.0
  %164 = vmatpush.msra.mxu0 0.0
  %165 = vmatpush.msra.mxu0 0.0
  %166 = vmatpush.msra.mxu0 0.0
  %167 = vmatpush.msra.mxu0 0.0
  %168 = vmatpush.msra.mxu0 %v110
  %169 = vmatpush.msra.mxu0 %v72
  %170 = vmatpush.msra.mxu0 %v56
  %171 = vmatpush.msra.mxu0 %v40
  %172 = vmatpush.msra.mxu0 %v24
  %173 = vmatmul.f32.gmra.mxu0 %v106
  %v174 = vpop.f32.mrf.mxu0
  %v175 = vadd.f32 0.0, %v174
  %176 = vdwg.mxu0
  %177 = vmatpush.msra.mxu0 0.0
  %178 = vmatpush.msra.mxu0 0.0
  %179 = vmatpush.msra.mxu0 0.0
  %180 = vmatpush.msra.mxu0 0.0
  %181 = vmatpush.msra.mxu0 0.0
  %182 = vmatpush.msra.mxu0 0.0
  %183 = vmatpush.msra.mxu0 0.0
  %184 = vmatpush.msra.mxu0 0.0
  %185 = vmatpush.msra.mxu0 0.0
  %186 = vmatpush.msra.mxu0 0.0
  %187 = vmatpush.msra.mxu0 0.0
  %188 = vmatpush.msra.mxu0 %v113
  %189 = vmatpush.msra.mxu0 %v73
  %190 = vmatpush.msra.mxu0 %v57
  %191 = vmatpush.msra.mxu0 %v41
  %192 = vmatpush.msra.mxu0 %v25
  %193 = vmatmul.f32.gmra.mxu0 %v106
  %v194 = vpop.f32.mrf.mxu0
  %v195 = vadd.f32 0.0, %v194
  %196 = vdwg.mxu0
  %197 = vmatpush.msra.mxu0 0.0
  %198 = vmatpush.msra.mxu0 0.0
  %199 = vmatpush.msra.mxu0 0.0
  %200 = vmatpush.msra.mxu0 0.0
  %201 = vmatpush.msra.mxu0 0.0
  %202 = vmatpush.msra.mxu0 0.0
  %203 = vmatpush.msra.mxu0 0.0
  %204 = vmatpush.msra.mxu0 0.0
  %205 = vmatpush.msra.mxu0 0.0
  %206 = vmatpush.msra.mxu0 0.0
  %207 = vmatpush.msra.mxu0 0.0
  %208 = vmatpush.msra.mxu0 %v116
  %209 = vmatpush.msra.mxu0 %v74
  %210 = vmatpush.msra.mxu0 %v58
  %211 = vmatpush.msra.mxu0 %v42
  %212 = vmatpush.msra.mxu0 %v26
  %213 = vmatmul.f32.gmra.mxu0 %v106
  %v214 = vpop.f32.mrf.mxu0
  %v215 = vadd.f32 0.0, %v214
  %216 = vdwg.mxu0
  %217 = vmatpush.msra.mxu0 0.0
  %218 = vmatpush.msra.mxu0 0.0
  %219 = vmatpush.msra.mxu0 0.0
  %220 = vmatpush.msra.mxu0 0.0
  %221 = vmatpush.msra.mxu0 0.0
  %222 = vmatpush.msra.mxu0 0.0
  %223 = vmatpush.msra.mxu0 0.0
  %224 = vmatpush.msra.mxu0 0.0
  %225 = vmatpush.msra.mxu0 0.0
  %226 = vmatpush.msra.mxu0 0.0
  %227 = vmatpush.msra.mxu0 0.0
  %228 = vmatpush.msra.mxu0 %v119
  %229 = vmatpush.msra.mxu0 %v75
  %230 = vmatpush.msra.mxu0 %v59
  %231 = vmatpush.msra.mxu0 %v43
  %232 = vmatpush.msra.mxu0 %v27
  %233 = vmatmul.f32.gmra.mxu0 %v106
  %v234 = vpop.f32.mrf.mxu0
  %v235 = vadd.f32 0.0, %v234
  %236 = vdwg.mxu0
  %237 = vmatpush.msra.mxu0 0.0
  %238 = vmatpush.msra.mxu0 0.0
  %239 = vmatpush.msra.mxu0 0.0
  %240 = vmatpush.msra.mxu0 0.0
  %241 = vmatpush.msra.mxu0 0.0
  %242 = vmatpush.msra.mxu0 0.0
  %243 = vmatpush.msra.mxu0 0.0
  %244 = vmatpush.msra.mxu0 0.0
  %245 = vmatpush.msra.mxu0 0.0
  %246 = vmatpush.msra.mxu0 0.0
  %247 = vmatpush.msra.mxu0 0.0
  %248 = vmatpush.msra.mxu0 %v122
  %249 = vmatpush.msra.mxu0 %v76
  %250 = vmatpush.msra.mxu0 %v60
  %251 = vmatpush.msra.mxu0 %v44
  %252 = vmatpush.msra.mxu0 %v28
  %253 = vmatmul.f32.gmra.mxu0 %v106
  %v254 = vpop.f32.mrf.mxu0
  %v255 = vadd.f32 0.0, %v254
  %256 = vdwg.mxu0
  %257 = vmatpush.msra.mxu0 0.0
  %258 = vmatpush.msra.mxu0 0.0
  %259 = vmatpush.msra.mxu0 0.0
  %260 = vmatpush.msra.mxu0 0.0
  %261 = vmatpush.msra.mxu0 0.0
  %262 = vmatpush.msra.mxu0 0.0
  %263 = vmatpush.msra.mxu0 0.0
  %264 = vmatpush.msra.mxu0 0.0
  %265 = vmatpush.msra.mxu0 0.0
  %266 = vmatpush.msra.mxu0 0.0
  %267 = vmatpush.msra.mxu0 0.0
  %268 = vmatpush.msra.mxu0 %v125
  %269 = vmatpush.msra.mxu0 %v77
  %270 = vmatpush.msra.mxu0 %v61
  %271 = vmatpush.msra.mxu0 %v45
  %272 = vmatpush.msra.mxu0 %v29
  %273 = vmatmul.f32.gmra.mxu0 %v106
  %v274 = vpop.f32.mrf.mxu0
  %v275 = vadd.f32 0.0, %v274
  %276 = vdwg.mxu0
  %277 = vmatpush.msra.mxu0 0.0
  %278 = vmatpush.msra.mxu0 0.0
  %279 = vmatpush.msra.mxu0 0.0
  %280 = vmatpush.msra.mxu0 0.0
  %281 = vmatpush.msra.mxu0 0.0
  %282 = vmatpush.msra.mxu0 0.0
  %283 = vmatpush.msra.mxu0 0.0
  %284 = vmatpush.msra.mxu0 0.0
  %285 = vmatpush.msra.mxu0 0.0
  %286 = vmatpush.msra.mxu0 0.0
  %287 = vmatpush.msra.mxu0 0.0
  %288 = vmatpush.msra.mxu0 %v128
  %289 = vmatpush.msra.mxu0 %v78
  %290 = vmatpush.msra.mxu0 %v62
  %291 = vmatpush.msra.mxu0 %v46
  %292 = vmatpush.msra.mxu0 %v30
  %293 = vmatmul.f32.gmra.mxu0 %v106
  %v294 = vpop.f32.mrf.mxu0
  %v295 = vadd.f32 0.0, %v294
  %296 = vdwg.mxu0
  %297 = vmatpush.msra.mxu0 0.0
  %298 = vmatpush.msra.mxu0 0.0
  %299 = vmatpush.msra.mxu0 0.0
  %300 = vmatpush.msra.mxu0 0.0
  %301 = vmatpush.msra.mxu0 0.0
  %302 = vmatpush.msra.mxu0 0.0
  %303 = vmatpush.msra.mxu0 0.0
  %304 = vmatpush.msra.mxu0 0.0
  %305 = vmatpush.msra.mxu0 0.0
  %306 = vmatpush.msra.mxu0 0.0
  %307 = vmatpush.msra.mxu0 0.0
  %308 = vmatpush.msra.mxu0 %v131
  %309 = vmatpush.msra.mxu0 %v79
  %310 = vmatpush.msra.mxu0 %v63
  %311 = vmatpush.msra.mxu0 %v47
  %312 = vmatpush.msra.mxu0 %v31
  %313 = vmatmul.f32.gmra.mxu0 %v106
  %v314 = vpop.f32.mrf.mxu0
  %v315 = vadd.f32 0.0, %v314
  %316 = vdwg.mxu0
  %317 = vmatpush.msra.mxu0 0.0
  %318 = vmatpush.msra.mxu0 0.0
  %319 = vmatpush.msra.mxu0 0.0
  %320 = vmatpush.msra.mxu0 0.0
  %321 = vmatpush.msra.mxu0 0.0
  %322 = vmatpush.msra.mxu0 0.0
  %323 = vmatpush.msra.mxu0 0.0
  %324 = vmatpush.msra.mxu0 0.0
  %325 = vmatpush.msra.mxu0 0.0
  %326 = vmatpush.msra.mxu0 0.0
  %327 = vmatpush.msra.mxu0 0.0
  %328 = vmatpush.msra.mxu0 %v134
  %329 = vmatpush.msra.mxu0 %v80
  %330 = vmatpush.msra.mxu0 %v64
  %331 = vmatpush.msra.mxu0 %v48
  %332 = vmatpush.msra.mxu0 %v32
  %333 = vmatmul.f32.gmra.mxu0 %v106
  %v334 = vpop.f32.mrf.mxu0
  %v335 = vadd.f32 0.0, %v334
  %336 = vdwg.mxu0
  %337 = vmatpush.msra.mxu0 0.0
  %338 = vmatpush.msra.mxu0 0.0
  %339 = vmatpush.msra.mxu0 0.0
  %340 = vmatpush.msra.mxu0 0.0
  %341 = vmatpush.msra.mxu0 0.0
  %342 = vmatpush.msra.mxu0 0.0
  %343 = vmatpush.msra.mxu0 0.0
  %344 = vmatpush.msra.mxu0 0.0
  %345 = vmatpush.msra.mxu0 0.0
  %346 = vmatpush.msra.mxu0 0.0
  %347 = vmatpush.msra.mxu0 0.0
  %348 = vmatpush.msra.mxu0 %v137
  %349 = vmatpush.msra.mxu0 %v81
  %350 = vmatpush.msra.mxu0 %v65
  %351 = vmatpush.msra.mxu0 %v49
  %352 = vmatpush.msra.mxu0 %v33
  %353 = vmatmul.f32.gmra.mxu0 %v106
  %v354 = vpop.f32.mrf.mxu0
  %v355 = vadd.f32 0.0, %v354
  %356 = vdwg.mxu0
  %357 = vmatpush.msra.mxu0 0.0
  %358 = vmatpush.msra.mxu0 0.0
  %359 = vmatpush.msra.mxu0 0.0
  %360 = vmatpush.msra.mxu0 0.0
  %361 = vmatpush.msra.mxu0 0.0
  %362 = vmatpush.msra.mxu0 0.0
  %363 = vmatpush.msra.mxu0 0.0
  %364 = vmatpush.msra.mxu0 0.0
  %365 = vmatpush.msra.mxu0 0.0
  %366 = vmatpush.msra.mxu0 0.0
  %367 = vmatpush.msra.mxu0 0.0
  %368 = vmatpush.msra.mxu0 %v140
  %369 = vmatpush.msra.mxu0 %v82
  %370 = vmatpush.msra.mxu0 %v66
  %371 = vmatpush.msra.mxu0 %v50
  %372 = vmatpush.msra.mxu0 %v34
  %373 = vmatmul.f32.gmra.mxu0 %v106
  %v374 = vpop.f32.mrf.mxu0
  %v375 = vadd.f32 0.0, %v374
  %376 = vdwg.mxu0
  %377 = vmatpush.msra.mxu0 0.0
  %378 = vmatpush.msra.mxu0 0.0
  %379 = vmatpush.msra.mxu0 0.0
  %380 = vmatpush.msra.mxu0 0.0
  %381 = vmatpush.msra.mxu0 0.0
  %382 = vmatpush.msra.mxu0 0.0
  %383 = vmatpush.msra.mxu0 0.0
  %384 = vmatpush.msra.mxu0 0.0
  %385 = vmatpush.msra.mxu0 0.0
  %386 = vmatpush.msra.mxu0 0.0
  %387 = vmatpush.msra.mxu0 0.0
  %388 = vmatpush.msra.mxu0 %v143
  %389 = vmatpush.msra.mxu0 %v83
  %390 = vmatpush.msra.mxu0 %v67
  %391 = vmatpush.msra.mxu0 %v51
  %392 = vmatpush.msra.mxu0 %v35
  %393 = vmatmul.f32.gmra.mxu0 %v106
  %v394 = vpop.f32.mrf.mxu0
  %v395 = vadd.f32 0.0, %v394
  %396 = vdwg.mxu0
  %397 = vmatpush.msra.mxu0 0.0
  %398 = vmatpush.msra.mxu0 0.0
  %399 = vmatpush.msra.mxu0 0.0
  %400 = vmatpush.msra.mxu0 0.0
  %401 = vmatpush.msra.mxu0 0.0
  %402 = vmatpush.msra.mxu0 0.0
  %403 = vmatpush.msra.mxu0 0.0
  %404 = vmatpush.msra.mxu0 0.0
  %405 = vmatpush.msra.mxu0 0.0
  %406 = vmatpush.msra.mxu0 0.0
  %407 = vmatpush.msra.mxu0 0.0
  %408 = vmatpush.msra.mxu0 %v146
  %409 = vmatpush.msra.mxu0 %v84
  %410 = vmatpush.msra.mxu0 %v68
  %411 = vmatpush.msra.mxu0 %v52
  %412 = vmatpush.msra.mxu0 %v36
  %413 = vmatmul.f32.gmra.mxu0 %v106
  %v414 = vpop.f32.mrf.mxu0
  %v415 = vadd.f32 0.0, %v414
  %416 = vdwg.mxu0
  %417 = vmatpush.msra.mxu0 0.0
  %418 = vmatpush.msra.mxu0 0.0
  %419 = vmatpush.msra.mxu0 0.0
  %420 = vmatpush.msra.mxu0 0.0
  %421 = vmatpush.msra.mxu0 0.0
  %422 = vmatpush.msra.mxu0 0.0
  %423 = vmatpush.msra.mxu0 0.0
  %424 = vmatpush.msra.mxu0 0.0
  %425 = vmatpush.msra.mxu0 0.0
  %426 = vmatpush.msra.mxu0 0.0
  %427 = vmatpush.msra.mxu0 0.0
  %428 = vmatpush.msra.mxu0 %v149
  %429 = vmatpush.msra.mxu0 %v85
  %430 = vmatpush.msra.mxu0 %v69
  %431 = vmatpush.msra.mxu0 %v53
  %432 = vmatpush.msra.mxu0 %v37
  %433 = vmatmul.f32.gmra.mxu0 %v106
  %v434 = vpop.f32.mrf.mxu0
  %v435 = vadd.f32 0.0, %v434
  %436 = vdwg.mxu0
  %437 = vmatpush.msra.mxu0 0.0
  %438 = vmatpush.msra.mxu0 0.0
  %439 = vmatpush.msra.mxu0 0.0
  %440 = vmatpush.msra.mxu0 0.0
  %441 = vmatpush.msra.mxu0 0.0
  %442 = vmatpush.msra.mxu0 0.0
  %443 = vmatpush.msra.mxu0 0.0
  %444 = vmatpush.msra.mxu0 0.0
  %445 = vmatpush.msra.mxu0 0.0
  %446 = vmatpush.msra.mxu0 0.0
  %447 = vmatpush.msra.mxu0 0.0
  %448 = vmatpush.msra.mxu0 %v152
  %449 = vmatpush.msra.mxu0 %v86
  %450 = vmatpush.msra.mxu0 %v70
  %451 = vmatpush.msra.mxu0 %v54
  %452 = vmatpush.msra.mxu0 %v38
  %453 = vmatmul.f32.gmra.mxu0 %v106
  %v454 = vpop.f32.mrf.mxu0
  %v455 = vadd.f32 0.0, %v454
  %456 = vdwg.mxu0
  %457 = vmatpush.msra.mxu0 0.0
  %458 = vmatpush.msra.mxu0 0.0
  %459 = vmatpush.msra.mxu0 0.0
  %460 = vmatpush.msra.mxu0 0.0
  %461 = vmatpush.msra.mxu0 0.0
  %462 = vmatpush.msra.mxu0 0.0
  %463 = vmatpush.msra.mxu0 0.0
  %464 = vmatpush.msra.mxu0 0.0
  %465 = vmatpush.msra.mxu0 0.0
  %466 = vmatpush.msra.mxu0 0.0
  %467 = vmatpush.msra.mxu0 0.0
  %468 = vmatpush.msra.mxu0 %v155
  %469 = vmatpush.msra.mxu0 %v87
  %470 = vmatpush.msra.mxu0 %v71
  %471 = vmatpush.msra.mxu0 %v55
  %472 = vmatpush.msra.mxu0 %v39
  %473 = vmatmul.f32.gmra.mxu0 %v106
  %v474 = vpop.f32.mrf.mxu0
  %v475 = vadd.f32 0.0, %v474
  %476 = vdwg.mxu0
  %vm477 = vcmp.ge.f32.partialorder %v175, 0.0
  %vm478 = vcmp.ge.f32.partialorder %v195, 0.0
  %vm479 = vcmp.ge.f32.partialorder %v215, 0.0
  %vm480 = vcmp.ge.f32.partialorder %v235, 0.0
  %vm481 = vcmp.ge.f32.partialorder %v255, 0.0
  %vm482 = vcmp.ge.f32.partialorder %v275, 0.0
  %vm483 = vcmp.ge.f32.partialorder %v295, 0.0
  %vm484 = vcmp.ge.f32.partialorder %v315, 0.0
  %vm485 = vcmp.ge.f32.partialorder %v335, 0.0
  %vm486 = vcmp.ge.f32.partialorder %v355, 0.0
  %vm487 = vcmp.ge.f32.partialorder %v375, 0.0
  %vm488 = vcmp.ge.f32.partialorder %v395, 0.0
  %vm489 = vcmp.ge.f32.partialorder %v415, 0.0
  %vm490 = vcmp.ge.f32.partialorder %v435, 0.0
  %vm491 = vcmp.ge.f32.partialorder %v455, 0.0
  %vm492 = vcmp.ge.f32.partialorder %v475, 0.0
  %v493 = vmul.f32 %v175, 0.2
  %v494 = vmul.f32 %v195, 0.2
  %v495 = vmul.f32 %v215, 0.2
  %v496 = vmul.f32 %v235, 0.2
  %v497 = vmul.f32 %v255, 0.2
  %v498 = vmul.f32 %v275, 0.2
  %v499 = vmul.f32 %v295, 0.2
  %v500 = vmul.f32 %v315, 0.2
  %v501 = vmul.f32 %v335, 0.2
  %v502 = vmul.f32 %v355, 0.2
  %v503 = vmul.f32 %v375, 0.2
  %v504 = vmul.f32 %v395, 0.2
  %v505 = vmul.f32 %v415, 0.2
  %v506 = vmul.f32 %v435, 0.2
  %v507 = vmul.f32 %v455, 0.2
  %v508 = vmul.f32 %v475, 0.2
  %v509 = vsel %vm477, %v175, %v493
  %v510 = vsel %vm478, %v195, %v494
  %v511 = vsel %vm479, %v215, %v495
  %v512 = vsel %vm480, %v235, %v496
  %v513 = vsel %vm481, %v255, %v497
  %v514 = vsel %vm482, %v275, %v498
  %v515 = vsel %vm483, %v295, %v499
  %v516 = vsel %vm484, %v315, %v500
  %v517 = vsel %vm485, %v335, %v501
  %v518 = vsel %vm486, %v355, %v502
  %v519 = vsel %vm487, %v375, %v503
  %v520 = vsel %vm488, %v395, %v504
  %v521 = vsel %vm489, %v415, %v505
  %v522 = vsel %vm490, %v435, %v506
  %v523 = vsel %vm491, %v455, %v507
  %v524 = vsel %vm492, %v475, %v508
  %v525 = vld [vmem:[%s4] sm:$0xff]
  %v526 = vld [vmem:[%s4 + $0x8] sm:$0xff]
  %v527 = vld [vmem:[%s3] sm:$0xf]
  %v528 = vld [vmem:[%s5] sm:$0xff]
  %v529 = vld [vmem:[%s5 + $0x8] sm:$0xff]
  %531 = vset.pattern.permute.xlu0 0
  %532 = vperm.xlu0 %531, %v528
  %v533 = vpop.permute.xlu0 %532
  %536 = vset.pattern.permute.xlu0 0
  %537 = vperm.xlu0 %536, %v529
  %v538 = vpop.permute.xlu0 %537
  %vm540 = vcmask 31744
  %v542 = vsel %vm540, %v525, 0
  %v545 = vsel %vm540, %v526, 0
  %vm547 = vcmask 1043456
  %v549 = vsel %vm547, %v527, 0
  %551 = vmatpush.msra.mxu0 0.0
  %552 = vmatpush.msra.mxu0 0.0
  %553 = vmatpush.msra.mxu0 0.0
  %554 = vmatpush.msra.mxu0 0.0
  %555 = vmatpush.msra.mxu0 0.0
  %556 = vmatpush.msra.mxu0 0.0
  %557 = vmatpush.msra.mxu0 0.0
  %558 = vmatpush.msra.mxu0 0.0
  %559 = vmatpush.msra.mxu0 0.0
  %560 = vmatpush.msra.mxu0 0.0
  %561 = vmatpush.msra.mxu0 0.0
  %562 = vmatpush.msra.mxu0 0.0
  %563 = vmatpush.msra.mxu0 0.0
  %564 = vmatpush.msra.mxu0 0.0
  %565 = vmatpush.msra.mxu0 0.0
  %566 = vmatpush.msra.mxu0 %v549
  %567 = vmatmul.f32.gmra.mxu0 %v542
  %v568 = vpop.f32.mrf.mxu0
  %v569 = vadd.f32 %v533, %v568
  %570 = vmatmul.f32.gmra.mxu0 %v545
  %v571 = vpop.f32.mrf.mxu0
  %v572 = vadd.f32 %v538, %v571
  %573 = vdwg.mxu0
  %v574 = vld [vmem:[%s2] sm:$0xff]
  %v575 = vld [vmem:[%s2 + $0x8] sm:$0xff]
  %vm576 = vcmask 64512
  %v578 = vsel %vm576, %v574, 0
  %v581 = vsel %vm576, %v575, 0
  %583 = vmatpush.msra.mxu0 0.0
  %584 = vmatpush.msra.mxu0 0.0
  %585 = vmatpush.msra.mxu0 0.0
  %586 = vmatpush.msra.mxu0 0.0
  %587 = vmatpush.msra.mxu0 0.0
  %588 = vmatpush.msra.mxu0 0.0
  %589 = vmatpush.msra.mxu0 0.0
  %590 = vmatpush.msra.mxu0 0.0
  %591 = vmatpush.msra.mxu0 0.0
  %592 = vmatpush.msra.mxu0 0.0
  %593 = vmatpush.msra.mxu0 0.0
  %594 = vmatpush.msra.mxu0 0.0
  %595 = vmatpush.msra.mxu0 0.0
  %596 = vmatpush.msra.mxu0 0.0
  %597 = vmatpush.msra.mxu0 0.0
  %598 = vmatpush.msra.mxu0 %v509
  %599 = vmatmul.f32.gmra.mxu0 %v578
  %v600 = vpop.f32.mrf.mxu0
  %v601 = vadd.f32 0.0, %v600
  %602 = vmatmul.f32.gmra.mxu0 %v581
  %v603 = vpop.f32.mrf.mxu0
  %v604 = vadd.f32 0.0, %v603
  %605 = vdwg.mxu0
  %v606 = vadd.f32 %v569, %v601
  %v607 = vadd.f32 %v572, %v604
  %v608 = vld [vmem:[%s2 + $0x10] sm:$0xff]
  %v609 = vld [vmem:[%s2 + $0x18] sm:$0xff]
  %v611 = vsel %vm576, %v608, 0
  %v614 = vsel %vm576, %v609, 0
  %616 = vmatpush.msra.mxu0 0.0
  %617 = vmatpush.msra.mxu0 0.0
  %618 = vmatpush.msra.mxu0 0.0
  %619 = vmatpush.msra.mxu0 0.0
  %620 = vmatpush.msra.mxu0 0.0
  %621 = vmatpush.msra.mxu0 0.0
  %622 = vmatpush.msra.mxu0 0.0
  %623 = vmatpush.msra.mxu0 0.0
  %624 = vmatpush.msra.mxu0 0.0
  %625 = vmatpush.msra.mxu0 0.0
  %626 = vmatpush.msra.mxu0 0.0
  %627 = vmatpush.msra.mxu0 0.0
  %628 = vmatpush.msra.mxu0 0.0
  %629 = vmatpush.msra.mxu0 0.0
  %630 = vmatpush.msra.mxu0 0.0
  %631 = vmatpush.msra.mxu0 %v510
  %632 = vmatmul.f32.gmra.mxu0 %v611
  %v633 = vpop.f32.mrf.mxu0
  %v634 = vadd.f32 0.0, %v633
  %635 = vmatmul.f32.gmra.mxu0 %v614
  %v636 = vpop.f32.mrf.mxu0
  %v637 = vadd.f32 0.0, %v636
  %638 = vdwg.mxu0
  %v639 = vadd.f32 %v606, %v634
  %v640 = vadd.f32 %v607, %v637
  %v641 = vld [vmem:[%s2 + $0x20] sm:$0xff]
  %v642 = vld [vmem:[%s2 + $0x28] sm:$0xff]
  %v644 = vsel %vm576, %v641, 0
  %v647 = vsel %vm576, %v642, 0
  %649 = vmatpush.msra.mxu0 0.0
  %650 = vmatpush.msra.mxu0 0.0
  %651 = vmatpush.msra.mxu0 0.0
  %652 = vmatpush.msra.mxu0 0.0
  %653 = vmatpush.msra.mxu0 0.0
  %654 = vmatpush.msra.mxu0 0.0
  %655 = vmatpush.msra.mxu0 0.0
  %656 = vmatpush.msra.mxu0 0.0
  %657 = vmatpush.msra.mxu0 0.0
  %658 = vmatpush.msra.mxu0 0.0
  %659 = vmatpush.msra.mxu0 0.0
  %660 = vmatpush.msra.mxu0 0.0
  %661 = vmatpush.msra.mxu0 0.0
  %662 = vmatpush.msra.mxu0 0.0
  %663 = vmatpush.msra.mxu0 0.0
  %664 = vmatpush.msra.mxu0 %v511
  %665 = vmatmul.f32.gmra.mxu0 %v644
  %v666 = vpop.f32.mrf.mxu0
  %v667 = vadd.f32 0.0, %v666
  %668 = vmatmul.f32.gmra.mxu0 %v647
  %v669 = vpop.f32.mrf.mxu0
  %v670 = vadd.f32 0.0, %v669
  %671 = vdwg.mxu0
  %v672 = vadd.f32 %v639, %v667
  %v673 = vadd.f32 %v640, %v670
  %v674 = vld [vmem:[%s2 + $0x30] sm:$0xff]
  %v675 = vld [vmem:[%s2 + $0x38] sm:$0xff]
  %v677 = vsel %vm576, %v674, 0
  %v680 = vsel %vm576, %v675, 0
  %682 = vmatpush.msra.mxu0 0.0
  %683 = vmatpush.msra.mxu0 0.0
  %684 = vmatpush.msra.mxu0 0.0
  %685 = vmatpush.msra.mxu0 0.0
  %686 = vmatpush.msra.mxu0 0.0
  %687 = vmatpush.msra.mxu0 0.0
  %688 = vmatpush.msra.mxu0 0.0
  %689 = vmatpush.msra.mxu0 0.0
  %690 = vmatpush.msra.mxu0 0.0
  %691 = vmatpush.msra.mxu0 0.0
  %692 = vmatpush.msra.mxu0 0.0
  %693 = vmatpush.msra.mxu0 0.0
  %694 = vmatpush.msra.mxu0 0.0
  %695 = vmatpush.msra.mxu0 0.0
  %696 = vmatpush.msra.mxu0 0.0
  %697 = vmatpush.msra.mxu0 %v512
  %698 = vmatmul.f32.gmra.mxu0 %v677
  %v699 = vpop.f32.mrf.mxu0
  %v700 = vadd.f32 0.0, %v699
  %701 = vmatmul.f32.gmra.mxu0 %v680
  %v702 = vpop.f32.mrf.mxu0
  %v703 = vadd.f32 0.0, %v702
  %704 = vdwg.mxu0
  %v705 = vadd.f32 %v672, %v700
  %v706 = vadd.f32 %v673, %v703
  %v707 = vld [vmem:[%s2 + $0x40] sm:$0xff]
  %v708 = vld [vmem:[%s2 + $0x48] sm:$0xff]
  %v710 = vsel %vm576, %v707, 0
  %v713 = vsel %vm576, %v708, 0
  %715 = vmatpush.msra.mxu0 0.0
  %716 = vmatpush.msra.mxu0 0.0
  %717 = vmatpush.msra.mxu0 0.0
  %718 = vmatpush.msra.mxu0 0.0
  %719 = vmatpush.msra.mxu0 0.0
  %720 = vmatpush.msra.mxu0 0.0
  %721 = vmatpush.msra.mxu0 0.0
  %722 = vmatpush.msra.mxu0 0.0
  %723 = vmatpush.msra.mxu0 0.0
  %724 = vmatpush.msra.mxu0 0.0
  %725 = vmatpush.msra.mxu0 0.0
  %726 = vmatpush.msra.mxu0 0.0
  %727 = vmatpush.msra.mxu0 0.0
  %728 = vmatpush.msra.mxu0 0.0
  %729 = vmatpush.msra.mxu0 0.0
  %730 = vmatpush.msra.mxu0 %v513
  %731 = vmatmul.f32.gmra.mxu0 %v710
  %v732 = vpop.f32.mrf.mxu0
  %v733 = vadd.f32 0.0, %v732
  %734 = vmatmul.f32.gmra.mxu0 %v713
  %v735 = vpop.f32.mrf.mxu0
  %v736 = vadd.f32 0.0, %v735
  %737 = vdwg.mxu0
  %v738 = vadd.f32 %v705, %v733
  %v739 = vadd.f32 %v706, %v736
  %v740 = vld [vmem:[%s2 + $0x50] sm:$0xff]
  %v741 = vld [vmem:[%s2 + $0x58] sm:$0xff]
  %v743 = vsel %vm576, %v740, 0
  %v746 = vsel %vm576, %v741, 0
  %748 = vmatpush.msra.mxu0 0.0
  %749 = vmatpush.msra.mxu0 0.0
  %750 = vmatpush.msra.mxu0 0.0
  %751 = vmatpush.msra.mxu0 0.0
  %752 = vmatpush.msra.mxu0 0.0
  %753 = vmatpush.msra.mxu0 0.0
  %754 = vmatpush.msra.mxu0 0.0
  %755 = vmatpush.msra.mxu0 0.0
  %756 = vmatpush.msra.mxu0 0.0
  %757 = vmatpush.msra.mxu0 0.0
  %758 = vmatpush.msra.mxu0 0.0
  %759 = vmatpush.msra.mxu0 0.0
  %760 = vmatpush.msra.mxu0 0.0
  %761 = vmatpush.msra.mxu0 0.0
  %762 = vmatpush.msra.mxu0 0.0
  %763 = vmatpush.msra.mxu0 %v514
  %764 = vmatmul.f32.gmra.mxu0 %v743
  %v765 = vpop.f32.mrf.mxu0
  %v766 = vadd.f32 0.0, %v765
  %767 = vmatmul.f32.gmra.mxu0 %v746
  %v768 = vpop.f32.mrf.mxu0
  %v769 = vadd.f32 0.0, %v768
  %770 = vdwg.mxu0
  %v771 = vadd.f32 %v738, %v766
  %v772 = vadd.f32 %v739, %v769
  %v773 = vld [vmem:[%s2 + $0x60] sm:$0xff]
  %v774 = vld [vmem:[%s2 + $0x68] sm:$0xff]
  %v776 = vsel %vm576, %v773, 0
  %v779 = vsel %vm576, %v774, 0
  %781 = vmatpush.msra.mxu0 0.0
  %782 = vmatpush.msra.mxu0 0.0
  %783 = vmatpush.msra.mxu0 0.0
  %784 = vmatpush.msra.mxu0 0.0
  %785 = vmatpush.msra.mxu0 0.0
  %786 = vmatpush.msra.mxu0 0.0
  %787 = vmatpush.msra.mxu0 0.0
  %788 = vmatpush.msra.mxu0 0.0
  %789 = vmatpush.msra.mxu0 0.0
  %790 = vmatpush.msra.mxu0 0.0
  %791 = vmatpush.msra.mxu0 0.0
  %792 = vmatpush.msra.mxu0 0.0
  %793 = vmatpush.msra.mxu0 0.0
  %794 = vmatpush.msra.mxu0 0.0
  %795 = vmatpush.msra.mxu0 0.0
  %796 = vmatpush.msra.mxu0 %v515
  %797 = vmatmul.f32.gmra.mxu0 %v776
  %v798 = vpop.f32.mrf.mxu0
  %v799 = vadd.f32 0.0, %v798
  %800 = vmatmul.f32.gmra.mxu0 %v779
  %v801 = vpop.f32.mrf.mxu0
  %v802 = vadd.f32 0.0, %v801
  %803 = vdwg.mxu0
  %v804 = vadd.f32 %v771, %v799
  %v805 = vadd.f32 %v772, %v802
  %v806 = vld [vmem:[%s2 + $0x70] sm:$0xff]
  %v807 = vld [vmem:[%s2 + $0x78] sm:$0xff]
  %v809 = vsel %vm576, %v806, 0
  %v812 = vsel %vm576, %v807, 0
  %814 = vmatpush.msra.mxu0 0.0
  %815 = vmatpush.msra.mxu0 0.0
  %816 = vmatpush.msra.mxu0 0.0
  %817 = vmatpush.msra.mxu0 0.0
  %818 = vmatpush.msra.mxu0 0.0
  %819 = vmatpush.msra.mxu0 0.0
  %820 = vmatpush.msra.mxu0 0.0
  %821 = vmatpush.msra.mxu0 0.0
  %822 = vmatpush.msra.mxu0 0.0
  %823 = vmatpush.msra.mxu0 0.0
  %824 = vmatpush.msra.mxu0 0.0
  %825 = vmatpush.msra.mxu0 0.0
  %826 = vmatpush.msra.mxu0 0.0
  %827 = vmatpush.msra.mxu0 0.0
  %828 = vmatpush.msra.mxu0 0.0
  %829 = vmatpush.msra.mxu0 %v516
  %830 = vmatmul.f32.gmra.mxu0 %v809
  %v831 = vpop.f32.mrf.mxu0
  %v832 = vadd.f32 0.0, %v831
  %833 = vmatmul.f32.gmra.mxu0 %v812
  %v834 = vpop.f32.mrf.mxu0
  %v835 = vadd.f32 0.0, %v834
  %836 = vdwg.mxu0
  %v837 = vadd.f32 %v804, %v832
  %v838 = vadd.f32 %v805, %v835
  %v839 = vld [vmem:[%s2 + $0x80] sm:$0xff]
  %v840 = vld [vmem:[%s2 + $0x88] sm:$0xff]
  %v842 = vsel %vm576, %v839, 0
  %v845 = vsel %vm576, %v840, 0
  %847 = vmatpush.msra.mxu0 0.0
  %848 = vmatpush.msra.mxu0 0.0
  %849 = vmatpush.msra.mxu0 0.0
  %850 = vmatpush.msra.mxu0 0.0
  %851 = vmatpush.msra.mxu0 0.0
  %852 = vmatpush.msra.mxu0 0.0
  %853 = vmatpush.msra.mxu0 0.0
  %854 = vmatpush.msra.mxu0 0.0
  %855 = vmatpush.msra.mxu0 0.0
  %856 = vmatpush.msra.mxu0 0.0
  %857 = vmatpush.msra.mxu0 0.0
  %858 = vmatpush.msra.mxu0 0.0
  %859 = vmatpush.msra.mxu0 0.0
  %860 = vmatpush.msra.mxu0 0.0
  %861 = vmatpush.msra.mxu0 0.0
  %862 = vmatpush.msra.mxu0 %v517
  %863 = vmatmul.f32.gmra.mxu0 %v842
  %v864 = vpop.f32.mrf.mxu0
  %v865 = vadd.f32 0.0, %v864
  %866 = vmatmul.f32.gmra.mxu0 %v845
  %v867 = vpop.f32.mrf.mxu0
  %v868 = vadd.f32 0.0, %v867
  %869 = vdwg.mxu0
  %v870 = vadd.f32 %v837, %v865
  %v871 = vadd.f32 %v838, %v868
  %v872 = vld [vmem:[%s2 + $0x90] sm:$0xff]
  %v873 = vld [vmem:[%s2 + $0x98] sm:$0xff]
  %v875 = vsel %vm576, %v872, 0
  %v878 = vsel %vm576, %v873, 0
  %880 = vmatpush.msra.mxu0 0.0
  %881 = vmatpush.msra.mxu0 0.0
  %882 = vmatpush.msra.mxu0 0.0
  %883 = vmatpush.msra.mxu0 0.0
  %884 = vmatpush.msra.mxu0 0.0
  %885 = vmatpush.msra.mxu0 0.0
  %886 = vmatpush.msra.mxu0 0.0
  %887 = vmatpush.msra.mxu0 0.0
  %888 = vmatpush.msra.mxu0 0.0
  %889 = vmatpush.msra.mxu0 0.0
  %890 = vmatpush.msra.mxu0 0.0
  %891 = vmatpush.msra.mxu0 0.0
  %892 = vmatpush.msra.mxu0 0.0
  %893 = vmatpush.msra.mxu0 0.0
  %894 = vmatpush.msra.mxu0 0.0
  %895 = vmatpush.msra.mxu0 %v518
  %896 = vmatmul.f32.gmra.mxu0 %v875
  %v897 = vpop.f32.mrf.mxu0
  %v898 = vadd.f32 0.0, %v897
  %899 = vmatmul.f32.gmra.mxu0 %v878
  %v900 = vpop.f32.mrf.mxu0
  %v901 = vadd.f32 0.0, %v900
  %902 = vdwg.mxu0
  %v903 = vadd.f32 %v870, %v898
  %v904 = vadd.f32 %v871, %v901
  %v905 = vld [vmem:[%s2 + $0xa0] sm:$0xff]
  %v906 = vld [vmem:[%s2 + $0xa8] sm:$0xff]
  %v908 = vsel %vm576, %v905, 0
  %v911 = vsel %vm576, %v906, 0
  %913 = vmatpush.msra.mxu0 0.0
  %914 = vmatpush.msra.mxu0 0.0
  %915 = vmatpush.msra.mxu0 0.0
  %916 = vmatpush.msra.mxu0 0.0
  %917 = vmatpush.msra.mxu0 0.0
  %918 = vmatpush.msra.mxu0 0.0
  %919 = vmatpush.msra.mxu0 0.0
  %920 = vmatpush.msra.mxu0 0.0
  %921 = vmatpush.msra.mxu0 0.0
  %922 = vmatpush.msra.mxu0 0.0
  %923 = vmatpush.msra.mxu0 0.0
  %924 = vmatpush.msra.mxu0 0.0
  %925 = vmatpush.msra.mxu0 0.0
  %926 = vmatpush.msra.mxu0 0.0
  %927 = vmatpush.msra.mxu0 0.0
  %928 = vmatpush.msra.mxu0 %v519
  %929 = vmatmul.f32.gmra.mxu0 %v908
  %v930 = vpop.f32.mrf.mxu0
  %v931 = vadd.f32 0.0, %v930
  %932 = vmatmul.f32.gmra.mxu0 %v911
  %v933 = vpop.f32.mrf.mxu0
  %v934 = vadd.f32 0.0, %v933
  %935 = vdwg.mxu0
  %v936 = vadd.f32 %v903, %v931
  %v937 = vadd.f32 %v904, %v934
  %v938 = vld [vmem:[%s2 + $0xb0] sm:$0xff]
  %v939 = vld [vmem:[%s2 + $0xb8] sm:$0xff]
  %v941 = vsel %vm576, %v938, 0
  %v944 = vsel %vm576, %v939, 0
  %946 = vmatpush.msra.mxu0 0.0
  %947 = vmatpush.msra.mxu0 0.0
  %948 = vmatpush.msra.mxu0 0.0
  %949 = vmatpush.msra.mxu0 0.0
  %950 = vmatpush.msra.mxu0 0.0
  %951 = vmatpush.msra.mxu0 0.0
  %952 = vmatpush.msra.mxu0 0.0
  %953 = vmatpush.msra.mxu0 0.0
  %954 = vmatpush.msra.mxu0 0.0
  %955 = vmatpush.msra.mxu0 0.0
  %956 = vmatpush.msra.mxu0 0.0
  %957 = vmatpush.msra.mxu0 0.0
  %958 = vmatpush.msra.mxu0 0.0
  %959 = vmatpush.msra.mxu0 0.0
  %960 = vmatpush.msra.mxu0 0.0
  %961 = vmatpush.msra.mxu0 %v520
  %962 = vmatmul.f32.gmra.mxu0 %v941
  %v963 = vpop.f32.mrf.mxu0
  %v964 = vadd.f32 0.0, %v963
  %965 = vmatmul.f32.gmra.mxu0 %v944
  %v966 = vpop.f32.mrf.mxu0
  %v967 = vadd.f32 0.0, %v966
  %968 = vdwg.mxu0
  %v969 = vadd.f32 %v936, %v964
  %v970 = vadd.f32 %v937, %v967
  %v971 = vld [vmem:[%s2 + $0xc0] sm:$0xff]
  %v972 = vld [vmem:[%s2 + $0xc8] sm:$0xff]
  %v974 = vsel %vm576, %v971, 0
  %v977 = vsel %vm576, %v972, 0
  %979 = vmatpush.msra.mxu0 0.0
  %980 = vmatpush.msra.mxu0 0.0
  %981 = vmatpush.msra.mxu0 0.0
  %982 = vmatpush.msra.mxu0 0.0
  %983 = vmatpush.msra.mxu0 0.0
  %984 = vmatpush.msra.mxu0 0.0
  %985 = vmatpush.msra.mxu0 0.0
  %986 = vmatpush.msra.mxu0 0.0
  %987 = vmatpush.msra.mxu0 0.0
  %988 = vmatpush.msra.mxu0 0.0
  %989 = vmatpush.msra.mxu0 0.0
  %990 = vmatpush.msra.mxu0 0.0
  %991 = vmatpush.msra.mxu0 0.0
  %992 = vmatpush.msra.mxu0 0.0
  %993 = vmatpush.msra.mxu0 0.0
  %994 = vmatpush.msra.mxu0 %v521
  %995 = vmatmul.f32.gmra.mxu0 %v974
  %v996 = vpop.f32.mrf.mxu0
  %v997 = vadd.f32 0.0, %v996
  %998 = vmatmul.f32.gmra.mxu0 %v977
  %v999 = vpop.f32.mrf.mxu0
  %v1000 = vadd.f32 0.0, %v999
  %1001 = vdwg.mxu0
  %v1002 = vadd.f32 %v969, %v997
  %v1003 = vadd.f32 %v970, %v1000
  %v1004 = vld [vmem:[%s2 + $0xd0] sm:$0xff]
  %v1005 = vld [vmem:[%s2 + $0xd8] sm:$0xff]
  %v1007 = vsel %vm576, %v1004, 0
  %v1010 = vsel %vm576, %v1005, 0
  %1012 = vmatpush.msra.mxu0 0.0
  %1013 = vmatpush.msra.mxu0 0.0
  %1014 = vmatpush.msra.mxu0 0.0
  %1015 = vmatpush.msra.mxu0 0.0
  %1016 = vmatpush.msra.mxu0 0.0
  %1017 = vmatpush.msra.mxu0 0.0
  %1018 = vmatpush.msra.mxu0 0.0
  %1019 = vmatpush.msra.mxu0 0.0
  %1020 = vmatpush.msra.mxu0 0.0
  %1021 = vmatpush.msra.mxu0 0.0
  %1022 = vmatpush.msra.mxu0 0.0
  %1023 = vmatpush.msra.mxu0 0.0
  %1024 = vmatpush.msra.mxu0 0.0
  %1025 = vmatpush.msra.mxu0 0.0
  %1026 = vmatpush.msra.mxu0 0.0
  %1027 = vmatpush.msra.mxu0 %v522
  %1028 = vmatmul.f32.gmra.mxu0 %v1007
  %v1029 = vpop.f32.mrf.mxu0
  %v1030 = vadd.f32 0.0, %v1029
  %1031 = vmatmul.f32.gmra.mxu0 %v1010
  %v1032 = vpop.f32.mrf.mxu0
  %v1033 = vadd.f32 0.0, %v1032
  %1034 = vdwg.mxu0
  %v1035 = vadd.f32 %v1002, %v1030
  %v1036 = vadd.f32 %v1003, %v1033
  %v1037 = vld [vmem:[%s2 + $0xe0] sm:$0xff]
  %v1038 = vld [vmem:[%s2 + $0xe8] sm:$0xff]
  %v1040 = vsel %vm576, %v1037, 0
  %v1043 = vsel %vm576, %v1038, 0
  %1045 = vmatpush.msra.mxu0 0.0
  %1046 = vmatpush.msra.mxu0 0.0
  %1047 = vmatpush.msra.mxu0 0.0
  %1048 = vmatpush.msra.mxu0 0.0
  %1049 = vmatpush.msra.mxu0 0.0
  %1050 = vmatpush.msra.mxu0 0.0
  %1051 = vmatpush.msra.mxu0 0.0
  %1052 = vmatpush.msra.mxu0 0.0
  %1053 = vmatpush.msra.mxu0 0.0
  %1054 = vmatpush.msra.mxu0 0.0
  %1055 = vmatpush.msra.mxu0 0.0
  %1056 = vmatpush.msra.mxu0 0.0
  %1057 = vmatpush.msra.mxu0 0.0
  %1058 = vmatpush.msra.mxu0 0.0
  %1059 = vmatpush.msra.mxu0 0.0
  %1060 = vmatpush.msra.mxu0 %v523
  %1061 = vmatmul.f32.gmra.mxu0 %v1040
  %v1062 = vpop.f32.mrf.mxu0
  %v1063 = vadd.f32 0.0, %v1062
  %1064 = vmatmul.f32.gmra.mxu0 %v1043
  %v1065 = vpop.f32.mrf.mxu0
  %v1066 = vadd.f32 0.0, %v1065
  %1067 = vdwg.mxu0
  %v1068 = vadd.f32 %v1035, %v1063
  %v1069 = vadd.f32 %v1036, %v1066
  %v1070 = vld [vmem:[%s2 + $0xf0] sm:$0xff]
  %v1071 = vld [vmem:[%s2 + $0xf8] sm:$0xff]
  %v1073 = vsel %vm576, %v1070, 0
  %v1076 = vsel %vm576, %v1071, 0
  %1078 = vmatpush.msra.mxu0 0.0
  %1079 = vmatpush.msra.mxu0 0.0
  %1080 = vmatpush.msra.mxu0 0.0
  %1081 = vmatpush.msra.mxu0 0.0
  %1082 = vmatpush.msra.mxu0 0.0
  %1083 = vmatpush.msra.mxu0 0.0
  %1084 = vmatpush.msra.mxu0 0.0
  %1085 = vmatpush.msra.mxu0 0.0
  %1086 = vmatpush.msra.mxu0 0.0
  %1087 = vmatpush.msra.mxu0 0.0
  %1088 = vmatpush.msra.mxu0 0.0
  %1089 = vmatpush.msra.mxu0 0.0
  %1090 = vmatpush.msra.mxu0 0.0
  %1091 = vmatpush.msra.mxu0 0.0
  %1092 = vmatpush.msra.mxu0 0.0
  %1093 = vmatpush.msra.mxu0 %v524
  %1094 = vmatmul.f32.gmra.mxu0 %v1073
  %v1095 = vpop.f32.mrf.mxu0
  %v1096 = vadd.f32 0.0, %v1095
  %1097 = vmatmul.f32.gmra.mxu0 %v1076
  %v1098 = vpop.f32.mrf.mxu0
  %v1099 = vadd.f32 0.0, %v1098
  %1100 = vdwg.mxu0
  %v1101 = vadd.f32 %v1068, %v1096
  %v1102 = vadd.f32 %v1069, %v1099
  %1103 = vst [vmem:[%s6] sm:$0xff] %v1101
  %1104 = vst [vmem:[%s6 + $0x8] sm:$0xff] %v1102
  // Predicated region
  $region26: #{resnet_block_pallas.1} parent=0 // pred_check
    _
  $region27: #{resnet_block_pallas.1} parent=0 // pred_check_branch
    %1106 = sbr.rel (0) target = $region29
  $region28: #{resnet_block_pallas.1} parent=0 // pred_region
    _
  $region29: #{resnet_block_pallas.1} parent=0 // pred_fallthru
    _
  // Predicated region
  $region30: #{resnet_block_pallas.1} parent=0 // pred_check
    _
  $region31: #{resnet_block_pallas.1} parent=0 // pred_check_branch
    %1108 = sbr.rel (0) target = $region33
  $region32: #{resnet_block_pallas.1} parent=0 // pred_region
    _
  $region33: #{resnet_block_pallas.1} parent=0 // pred_fallthru
    _

</llo_original>
